<compile_context>
chip_gen: v6e
topology: v6e:2x2x1
jax: 0.10.0
libtpu: 0.0.40
codegen_flags: <defaults>
</compile_context>

<pallas_src>
import numpy as np
import jax
import jax.numpy as jnp
from jax.experimental import pallas as pl
from jax.experimental.pallas import tpu as pltpu


# ---------------------------------------------------------------------------
# Kernel: one (batch-block, spatial-tile) block per grid step.
#   x_ref : (bn, Cin, T)    activations, spatial flattened on the lane axis
#   w_ref : (Cout, Cin)     1x1 conv weight (resident across the grid)
#   b_ref : (Cout, 1)       bias (broadcast over lanes)
#   o_ref : (bn, Cout, T)   output, lane-dense (T is a multiple of 128 or full HW)
# ---------------------------------------------------------------------------
def _outconv_kernel(x_ref, w_ref, b_ref, o_ref):
    w = w_ref[...]
    b = b_ref[...]
    # bn is a small static block count; unrolled at trace time.
    for i in range(x_ref.shape[0]):
        acc = jnp.dot(w, x_ref[i], preferred_element_type=jnp.float32)
        o_ref[i] = (acc + b).astype(o_ref.dtype)


# ---------------------------------------------------------------------------
# Tile selection: byte-budgeted, masked ragged tail, batch blocking for small HW.
# ---------------------------------------------------------------------------
_X_BLOCK_BUDGET = 4 << 20   # ~4 MiB x-block per step: amortizes the ~0.35us/step
                            # overhead; double-buffered in+out stays far under
                            # v7x's 64 MiB physical VMEM even with Cout ~ Cin.
_BN_CAP = 8                 # max batch items packed into one grid step


def _select_tiles(n, cin, hw, dtype_bytes):
    """Pick (bn, t, n_spatial_tiles): batch items and spatial lanes per step."""
    if hw <= 128:
        t = hw                                        # full-dim block (always legal)
    else:
        max_lanes = max(128, (_X_BLOCK_BUDGET // (cin * dtype_bytes)) // 128 * 128)
        t = min(max_lanes, (hw // 128) * 128)         # multiple of 128; tail is masked
        # Single image: keep >= 2 spatial tiles so both v7x TensorCores get work
        # (no-op on single-core v5e/v6e).
        if n == 1 and t >= hw and hw >= 256:
            t = max(128, (pl.cdiv(hw, 2) // 128) * 128)
    n_tiles = pl.cdiv(hw, t)

    bn = 1
    if n_tiles == 1 and n > 1:
        # Small images: pack several batch items per step to amortize step
        # overhead, but keep >= 2 grid steps on the (parallel) batch axis.
        per_item = max(cin * t * dtype_bytes, 1)
        cap = min(_BN_CAP, max(1, _X_BLOCK_BUDGET // per_item), max(1, n // 2))
        bn = max(d for d in range(1, cap + 1) if n % d == 0)
    return bn, t, n_tiles


def outconv_forward(x_nchw, weight_oihw, bias):
    """y = Conv2d(kernel_size=1)(x) with PyTorch NCHW / OIHW conventions."""
    n, cin, h, w = x_nchw.shape
    cout = weight_oihw.shape[0]
    hw = h * w
    dtype_bytes = jnp.dtype(x_nchw.dtype).itemsize

    # Contiguous collapse of (H, W) -> HW; no relayout, no transpose.
    x_flat = x_nchw.reshape(n, cin, hw)
    w2 = weight_oihw.reshape(cout, cin)
    b2 = bias.reshape(cout, 1)

    bn, t, n_tiles = _select_tiles(n, cin, hw, dtype_bytes)
    grid = (n // bn, n_tiles)

    # Explicit VMEM budget: ~double-buffered x/out blocks + resident weight/bias,
    # clamped under v7x's 64 MiB physical VMEM (and above v5e's 16 MiB default).
    block_bytes = bn * (cin + cout) * t * dtype_bytes
    resident_bytes = (cout * cin + cout) * dtype_bytes
    vmem_limit = int(min(64 << 20,
                         max(32 << 20, 3 * block_bytes + resident_bytes + (1 << 20))))

    cost = pl.CostEstimate(
        flops=2 * n * hw * cin * cout,
        transcendentals=0,
        bytes_accessed=dtype_bytes * (n * hw * (cin + cout) + cout * cin + cout),
    )

    out = pl.pallas_call(
        _outconv_kernel,
        out_shape=jax.ShapeDtypeStruct((n, cout, hw), x_nchw.dtype),
        grid=grid,
        in_specs=[
            pl.BlockSpec((bn, cin, t), lambda i, j: (i, 0, j)),
            pl.BlockSpec((cout, cin), lambda i, j: (0, 0)),
            pl.BlockSpec((cout, 1), lambda i, j: (0, 0)),
        ],
        out_specs=pl.BlockSpec((bn, cout, t), lambda i, j: (i, 0, j)),
        compiler_params=pltpu.CompilerParams(
            dimension_semantics=("parallel", "parallel"),
            vmem_limit_bytes=vmem_limit,
        ),
        cost_estimate=cost,
    )(x_flat, w2, b2)

    return out.reshape(n, cout, h, w)


# ---------------------------------------------------------------------------
# Pure-JAX reference (same math) for verification.
# ---------------------------------------------------------------------------
def _ref_forward(x_nchw, weight_oihw, bias):
    w2 = weight_oihw[:, :, 0, 0]
    y = jnp.einsum('oi,nihw->nohw', w2, x_nchw)
    return y + bias[None, :, None, None]


def init_params(key, in_channels, out_channels):
    kw, kb = jax.random.split(key, 2)
    bound = 1.0 / np.sqrt(in_channels * 1 * 1)   # PyTorch Conv2d default init bound
    weight = jax.random.uniform(kw, (out_channels, in_channels, 1, 1),
                                jnp.float32, -bound, bound)
    bias = jax.random.uniform(kb, (out_channels,), jnp.float32, -bound, bound)
    return weight, bias


if __name__ == "__main__":
    key = jax.random.PRNGKey(0)
    kx0, kx1, kx2, kp = jax.random.split(key, 4)

    cin, cout = 8, 4
    weight, bias = init_params(kp, in_channels=cin, out_channels=cout)

    # Primary shape (the module spec at small size) plus two shapes that
    # exercise the new tiling paths: masked ragged tail and batch blocking.
    test_cases = [
        (kx0, (2, cin, 16, 16)),   # hw = 256 (exact 128-multiple), grid (2, 1)
        (kx1, (2, cin, 20, 20)),   # hw = 400 -> T = 384, ragged masked tail
        (kx2, (4, cin, 16, 16)),   # small hw, n = 4 -> batch-blocked (bn = 2)
    ]
    for k, shape in test_cases:
        x = jax.random.normal(k, shape, jnp.float32)         # NCHW
        out = jax.block_until_ready(outconv_forward(x, weight, bias))
        ref = jax.block_until_ready(_ref_forward(x, weight, bias))
        assert out.shape == ref.shape, (out.shape, ref.shape)
        np.testing.assert_allclose(np.asarray(out), np.asarray(ref),
                                   rtol=1e-5, atol=1e-5)

    print("KERNEL_OK")
</pallas_src>

<mosaic_0001>
module attributes {stable_mosaic.version = 11 : i64} {
  func.func @_outconv_kernel(%arg0: i32, %arg1: i32, %arg2: memref<1x8x256xf32, #tpu.memory_space<vmem>>, %arg3: memref<4x8xf32, #tpu.memory_space<vmem>>, %arg4: memref<4x1xf32, #tpu.memory_space<vmem>>, %arg5: memref<1x4x256xf32, #tpu.memory_space<vmem>>) attributes {dimension_semantics = [#tpu.dimension_semantics<parallel>, #tpu.dimension_semantics<parallel>], iteration_bounds = array<i64: 2, 1>, scalar_prefetch = 0 : i64, scratch_operands = 0 : i64, tpu.core_type = #tpu.core_type<tc>, window_params = [{transform_indices = @transform_0, window_bounds = array<i64: 1, 8, 256>}, {pipeline_mode = #tpu.pipeline_mode<synchronous>, transform_indices = @transform_1, window_bounds = array<i64: 4, 8>}, {pipeline_mode = #tpu.pipeline_mode<synchronous>, transform_indices = @transform_2, window_bounds = array<i64: 4, 1>}, {transform_indices = @transform_3, window_bounds = array<i64: 1, 4, 256>}]} {
    %c0 = arith.constant 0 : index
    %c0_0 = arith.constant 0 : index
    %0 = vector.load %arg3[%c0, %c0_0] : memref<4x8xf32, #tpu.memory_space<vmem>>, vector<4x8xf32>
    %c0_1 = arith.constant 0 : index
    %c0_2 = arith.constant 0 : index
    %1 = vector.load %arg4[%c0_1, %c0_2] : memref<4x1xf32, #tpu.memory_space<vmem>>, vector<4x1xf32>
    %c0_3 = arith.constant 0 : index
    %c0_4 = arith.constant 0 : index
    %c0_5 = arith.constant 0 : index
    %2 = vector.load %arg2[%c0_3, %c0_4, %c0_5] : memref<1x8x256xf32, #tpu.memory_space<vmem>>, vector<1x8x256xf32>
    %3 = vector.shape_cast %2 : vector<1x8x256xf32> to vector<8x256xf32>
    %cst = arith.constant dense<0.000000e+00> : vector<4x256xf32>
    %4 = tpu.matmul %0, %3, %cst {dimension_numbers = #tpu.dot_dimension_numbers<[1], [0], [0], [1], [0, 0, 1, 1], [], []>} : vector<4x8xf32>, vector<8x256xf32>, vector<4x256xf32> -> vector<4x256xf32>
    %5 = vector.broadcast %1 : vector<4x1xf32> to vector<4x256xf32>
    %6 = arith.addf %4, %5 : vector<4x256xf32>
    %c0_6 = arith.constant 0 : index
    %c0_7 = arith.constant 0 : index
    %c0_8 = arith.constant 0 : index
    %7 = vector.load %arg5[%c0_6, %c0_7, %c0_8] : memref<1x4x256xf32, #tpu.memory_space<vmem>>, vector<1x4x256xf32>
    %8 = vector.shape_cast %7 : vector<1x4x256xf32> to vector<4x256xf32>
    %9 = vector.shape_cast %6 : vector<4x256xf32> to vector<1x4x256xf32>
    tpu.vector_store %arg5[%c0_6, %c0_7, %c0_8], %9 {strides = array<i32>} : memref<1x4x256xf32, #tpu.memory_space<vmem>>, vector<1x4x256xf32>,
    return
  }
  func.func @transform_0(%arg0: i32, %arg1: i32) -> (i32, i32, i32) {
    %c0_i32 = arith.constant 0 : i32
    %c0_i32_0 = arith.constant 0 : i32
    return %arg0, %c0_i32, %arg1 : i32, i32, i32
  }
  func.func @transform_1(%arg0: i32, %arg1: i32) -> (i32, i32) {
    %c0_i32 = arith.constant 0 : i32
    %c0_i32_0 = arith.constant 0 : i32
    %c0_i32_1 = arith.constant 0 : i32
    return %c0_i32, %c0_i32_0 : i32, i32
  }
  func.func @transform_2(%arg0: i32, %arg1: i32) -> (i32, i32) {
    %c0_i32 = arith.constant 0 : i32
    %c0_i32_0 = arith.constant 0 : i32
    %c0_i32_1 = arith.constant 0 : i32
    return %c0_i32, %c0_i32_0 : i32, i32
  }
  func.func @transform_3(%arg0: i32, %arg1: i32) -> (i32, i32, i32) {
    %c0_i32 = arith.constant 0 : i32
    %c0_i32_0 = arith.constant 0 : i32
    return %arg0, %c0_i32, %arg1 : i32, i32, i32
  }
}

</mosaic_0001>

<llo_original>
// kernel: tpu_custom_call.1
$region0: #{tpu_custom_call.1}
  #allocation0 [shape = 'u32[]', space=smem, size = 0x4, offset = 0x4, fixed_abs, tag = 'smem constant byte address 0x4 - core index']
  #allocation1 [shape = 'u32[144,128]{1,0:T(1,128)}', space=vmem, size = 0x12000, scoped, tag = 'internal scratch']
  %s0 = inlined_call_operand.hbm [shape: f32[2,8,256], index: 0, kind: input, shape index: {}]
  %s1 = inlined_call_operand.vmem [shape: f32[4,8], index: 1, kind: input, shape index: {}]
  %s2 = inlined_call_operand.vmem [shape: f32[4,1], index: 2, kind: input, shape index: {}]
  %s3 = inlined_call_operand.hbm [shape: f32[2,4,256], index: 3, kind: output, shape index: {}]
  %s4 = sld [smem:[#allocation0]]
  $region49: #{tpu_custom_call.1} parent=0
    _
  %s6 = ssub.s32 1, %s4
  %s7 = scalar_select 0, %s6, %s4
  $region1: #{tpu_custom_call.1} parent=0
    #allocation2 [shape = 'u8[16384]{0}', space=vmem, size = 0x4000, scoped, tag = 'input window, operand 0']
    #allocation3 [shape = 's32[2]{0}', space=sflag, size = 0x8, scoped, tag = 'scoped memory for tpu_custom_call.1']
    #allocation4 [shape = 's32[2]{0}', space=sflag, size = 0x8, scoped, tag = 'scoped memory for tpu_custom_call.1']
    #allocation5 [shape = 'u8[8192]{0}', space=vmem, size = 0x2000, scoped, tag = 'output window, operand 0']
    %8 = vsyncpa [#allocation3], 0
    %s9 = scalar_lea.sflag [#allocation3], 1
    %10 = vsyncpa %s9, 0
    %11 = vsyncpa [#allocation4], 0
    %s12 = scalar_lea.sflag [#allocation4], 1
    %13 = vsyncpa %s12, 0
    loop: start=0, step=1, limit=4
    $region2: #{tpu_custom_call.1} parent=1 // loop_pre_header
      _
    $region3: #{tpu_custom_call.1} parent=1 // loop_header
      %s15 = sphi 0, %s19
      %p16 = scmp.ge.s32.totalorder %s15, 4
      %s22 = sphi 0, %s34
      %s23 = sphi 0, %s30
      %s24 = sphi 0, %s22
      %s25 = sphi 0, %s23
      %s26 = sphi 0, %s24
      %s27 = sphi 0, %s25
      %s39 = sphi 0, %s41
      %s42 = sphi 0, %s39
      %s43 = sphi 0, %s42
      %s59 = sphi 0, %s43
      %s63 = sphi 0, %s63
      %s65 = sphi 0, %s63
      %s66 = sphi 0, %s65
      %s80 = sphi 0, %s66
      %s84 = sphi 0, %s84
      %s86 = sphi 0, %s84
      %s87 = sphi 0, %s86
      %s101 = sphi 0, %s87
      %s109 = sphi 0, %s111
      %s112 = sphi 0, %s109
      %s113 = sphi 0, %s112
      %s129 = sphi 0, %s113
    $region4: #{tpu_custom_call.1} parent=1 // loop_header_branch
      %18 = sbr.rel (%p16) target = $region8
    $region5: #{tpu_custom_call.1} parent=1 // loop_body
      %s20 = ssub.s32 %s15, 1
      %s21 = ssub.s32 %s15, 2
      %s28 = sadd.s32 1, %s23
      %p29 = scmp.ge.s32.totalorder %s28, 1
      %s30 = scalar_select %p29, 0, %s28
      %s31 = sadd.s32 1, %s22
      %s32 = scalar_select %p29, %s31, %s22
      %p33 = scmp.ge.s32.totalorder %s32, 2
      %s34 = scalar_select %p33, 0, %s32
      %s35 = ssub.s32 %s22, %s34
      %s36 = ssub.s32 %s23, %s30
      %s37 = sor.u32 %s35, %s36
      %p38 = scmp.eq.s32.totalorder %s37, 0
      %s40 = sadd.s32 %s39, 1
      %s41 = scalar_select %p38, %s39, %s40
      %p44 = pneg %p38
      %p45 = scmp.eq.s32.totalorder %s15, 1
      %p46 = por %p44, %p45
      %p47 = scmp.ne.s32.totalorder %s39, %s42
      %p48 = scmp.eq.s32.totalorder %s15, 0
      %p49 = por %p47, %p48
      %p50 = scmp.ne.s32.totalorder %s39, %s42
      %p51 = scmp.eq.s32.totalorder %s20, 1
      %p52 = por %p50, %p51
      %p53 = scmp.ne.s32.totalorder %s42, %s43
      %p54 = scmp.eq.s32.totalorder %s20, 0
      %p55 = por %p53, %p54
      %p56 = scmp.ne.s32.totalorder %s42, %s43
      %p57 = scmp.eq.s32.totalorder %s21, 1
      %p58 = por %p56, %p57
      %p60 = scmp.ne.s32.totalorder %s43, %s59
      %p61 = scmp.eq.s32.totalorder %s21, 0
      %p62 = por %p60, %p61
      %s64 = sadd.s32 %s63, 1
      %p67 = scmp.eq.s32.totalorder %s15, 1
      %p68 = scmp.ne.s32.totalorder %s63, %s65
      %p69 = scmp.eq.s32.totalorder %s15, 0
      %p70 = por %p68, %p69
      %p71 = scmp.ne.s32.totalorder %s63, %s65
      %p72 = scmp.eq.s32.totalorder %s20, 1
      %p73 = por %p71, %p72
      %p74 = scmp.ne.s32.totalorder %s65, %s66
      %p75 = scmp.eq.s32.totalorder %s20, 0
      %p76 = por %p74, %p75
      %p77 = scmp.ne.s32.totalorder %s65, %s66
      %p78 = scmp.eq.s32.totalorder %s21, 1
      %p79 = por %p77, %p78
      %p81 = scmp.ne.s32.totalorder %s66, %s80
      %p82 = scmp.eq.s32.totalorder %s21, 0
      %p83 = por %p81, %p82
      %s85 = sadd.s32 %s84, 1
      %p88 = scmp.eq.s32.totalorder %s15, 1
      %p89 = scmp.ne.s32.totalorder %s84, %s86
      %p90 = scmp.eq.s32.totalorder %s15, 0
      %p91 = por %p89, %p90
      %p92 = scmp.ne.s32.totalorder %s84, %s86
      %p93 = scmp.eq.s32.totalorder %s20, 1
      %p94 = por %p92, %p93
      %p95 = scmp.ne.s32.totalorder %s86, %s87
      %p96 = scmp.eq.s32.totalorder %s20, 0
      %p97 = por %p95, %p96
      %p98 = scmp.ne.s32.totalorder %s86, %s87
      %p99 = scmp.eq.s32.totalorder %s21, 1
      %p100 = por %p98, %p99
      %p102 = scmp.ne.s32.totalorder %s87, %s101
      %p103 = scmp.eq.s32.totalorder %s21, 0
      %p104 = por %p102, %p103
      %s105 = ssub.s32 %s22, %s34
      %s106 = ssub.s32 %s23, %s30
      %s107 = sor.u32 %s105, %s106
      %p108 = scmp.eq.s32.totalorder %s107, 0
      %s110 = sadd.s32 %s109, 1
      %s111 = scalar_select %p108, %s109, %s110
      %p114 = pneg %p108
      %p115 = scmp.eq.s32.totalorder %s15, 1
      %p116 = por %p114, %p115
      %p117 = scmp.ne.s32.totalorder %s109, %s112
      %p118 = scmp.eq.s32.totalorder %s15, 0
      %p119 = por %p117, %p118
      %p120 = scmp.ne.s32.totalorder %s109, %s112
      %p121 = scmp.eq.s32.totalorder %s20, 1
      %p122 = por %p120, %p121
      %p123 = scmp.ne.s32.totalorder %s112, %s113
      %p124 = scmp.eq.s32.totalorder %s20, 0
      %p125 = por %p123, %p124
      %p126 = scmp.ne.s32.totalorder %s112, %s113
      %p127 = scmp.eq.s32.totalorder %s21, 1
      %p128 = por %p126, %p127
      %p130 = scmp.ne.s32.totalorder %s113, %s129
      %p131 = scmp.eq.s32.totalorder %s21, 0
      %p132 = por %p130, %p131
      %p133 = scmp.le.s32.totalorder 1, %s15
      %p134 = scmp.lt.s32.totalorder %s15, 3
      %p135 = pnand %p133, %p134
      %p136 = pneg %p135
      // Predicated region
      $region9: #{tpu_custom_call.1} parent=5 // pred_check
        _
      $region10: #{tpu_custom_call.1} parent=5 // pred_check_branch
        %138 = sbr.rel (%p135) target = $region12
      $region11: #{tpu_custom_call.1} parent=5 // pred_region
        %s139 = ssub.s32 %s15, 1
        // Predicated region
        $region13: #{tpu_custom_call.1} parent=11 // pred_check
          %p140 = pneg %p76
        $region14: #{tpu_custom_call.1} parent=11 // pred_check_branch
          %142 = sbr.rel (%p140) target = $region16
        $region15: #{tpu_custom_call.1} parent=11 // pred_region
          _
        $region16: #{tpu_custom_call.1} parent=11 // pred_fallthru
          _
        // Predicated region
        $region17: #{tpu_custom_call.1} parent=11 // pred_check
          %p143 = pneg %p97
        $region18: #{tpu_custom_call.1} parent=11 // pred_check_branch
          %145 = sbr.rel (%p143) target = $region20
        $region19: #{tpu_custom_call.1} parent=11 // pred_region
          _
        $region20: #{tpu_custom_call.1} parent=11 // pred_fallthru
          _
      $region12: #{tpu_custom_call.1} parent=5 // pred_fallthru
        _
      %p146 = scmp.lt.s32.totalorder %s15, 2
      // Predicated region
      $region21: #{tpu_custom_call.1} parent=5 // pred_check
        %p147 = pneg %p146
      $region22: #{tpu_custom_call.1} parent=5 // pred_check_branch
        %149 = sbr.rel (%p147) target = $region24
      $region23: #{tpu_custom_call.1} parent=5 // pred_region
        // Predicated region
        $region25: #{tpu_custom_call.1} parent=23 // pred_check
          %p150 = pneg %p49
        $region26: #{tpu_custom_call.1} parent=23 // pred_check_branch
          %152 = sbr.rel (%p150) target = $region28
        $region27: #{tpu_custom_call.1} parent=23 // pred_region
          %s153 = sand.u32 %s39, 1
          %s154 = scalar_lea.sflag [#allocation3], %s153
          %s155 = sand.u32 %s39, 1
          %s156 = smul.addr %s155, 16
          %s157 = scalar_lea.vmem [#allocation2], %s156
          %s158 = smul.u32 2, %s23
          %s160 = ssub.s32 256, 256
          %161 = vsyncadd %s154, %s160
          %s162 = smul.addr %s22, 2
          %s163 = sadd.s32 %s158, %s162
          %s164 = smul.addr %s163, 128
          %s165 = scalar_lea.hbm %s0, %s164
          %s167 = sshll.u32 %s157, 4
          %s168 = int_to_ptr.vmem [resolvable:$true] %s167
          %170 = dma.hbm_to_vmem [thread:$0]  %s165, 256, %s168, %s154
        $region28: #{tpu_custom_call.1} parent=23 // pred_fallthru
          _
      $region24: #{tpu_custom_call.1} parent=5 // pred_fallthru
        _
      %p171 = scmp.le.s32.totalorder 1, %s15
      %p172 = scmp.lt.s32.totalorder %s15, 3
      %p173 = pnand %p171, %p172
      %p174 = pneg %p173
      // Predicated region
      $region29: #{tpu_custom_call.1} parent=5 // pred_check
        _
      $region30: #{tpu_custom_call.1} parent=5 // pred_check_branch
        %176 = sbr.rel (%p173) target = $region32
      $region31: #{tpu_custom_call.1} parent=5 // pred_region
        %s177 = ssub.s32 %s15, 1
        %s178 = sand.u32 %s42, 1
        %s179 = scalar_lea.sflag [#allocation3], %s178
        %s180 = sand.u32 %s42, 1
        %s181 = smul.addr %s180, 16
        %s182 = scalar_lea.vmem [#allocation2], %s181
        // Predicated region
        $region33: #{tpu_custom_call.1} parent=31 // pred_check
          %p183 = pneg %p55
        $region34: #{tpu_custom_call.1} parent=31 // pred_check_branch
          %185 = sbr.rel (%p183) target = $region36
        $region35: #{tpu_custom_call.1} parent=31 // pred_region
          %186 = dma.done %s179, 256
        $region36: #{tpu_custom_call.1} parent=31 // pred_fallthru
          _
        %s187 = sand.u32 %s42, 1
        %s188 = scalar_lea.sflag [#allocation3], %s187
        %s189 = sand.u32 %s42, 1
        %s190 = smul.addr %s189, 16
        %s191 = scalar_lea.vmem [#allocation2], %s190
        %p192 = pneg %p55
        %p193 = pneg %p52
        %p194 = pneg %p76
        %p195 = pneg %p73
        %p196 = pneg %p97
        %p197 = pneg %p94
        %p198 = pneg %p125
        %p199 = pneg %p122
        %s200 = sand.u32 %s112, 1
        %s201 = scalar_lea.sflag [#allocation4], %s200
        %s202 = sand.u32 %s112, 1
        %s203 = smul.addr %s202, 8
        %s204 = scalar_lea.vmem [#allocation5], %s203
        %s205 = smul.u32 2, %s25
        %s206 = smul.u32 2, %s25
        %v207 = vld [vmem:[%s1] sm:$0xf]
        %v208 = vld [vmem:[%s2] sm:$0xf]
        %v209 = vld [vmem:[%s182] sm:$0xff]
        %v210 = vld [vmem:[%s182 + $0x8] sm:$0xff]
        %212 = vset.pattern.permute.xlu0 0
        %213 = vperm.xlu0 %212, %v208
        %v214 = vpop.permute.xlu0 %213
        %vm216 = vcmask 64512
        %v218 = vsel %vm216, %v207, 0
        %220 = vmatprep.subr.mxu0 0.0
        %221 = vmatpush1.msra.mxu0 0.0
        %222 = vmatprep.subr.mxu0 0.0
        %223 = vmatpush1.msra.mxu0 0.0
        %224 = vmatprep.subr.mxu0 0.0
        %225 = vmatpush1.msra.mxu0 0.0
        %226 = vmatprep.subr.mxu0 0.0
        %227 = vmatpush1.msra.mxu0 0.0
        %228 = vmatprep.subr.mxu0 0.0
        %229 = vmatpush1.msra.mxu0 0.0
        %230 = vmatprep.subr.mxu0 0.0
        %231 = vmatpush1.msra.mxu0 0.0
        %232 = vmatprep.subr.mxu0 0.0
        %233 = vmatpush1.msra.mxu0 0.0
        %234 = vmatprep.subr.mxu0 0.0
        %235 = vmatpush1.msra.mxu0 0.0
        %236 = vmatprep.subr.mxu0 0.0
        %237 = vmatpush1.msra.mxu0 0.0
        %238 = vmatprep.subr.mxu0 0.0
        %239 = vmatpush1.msra.mxu0 0.0
        %240 = vmatprep.subr.mxu0 0.0
        %241 = vmatpush1.msra.mxu0 0.0
        %242 = vmatprep.subr.mxu0 0.0
        %243 = vmatpush1.msra.mxu0 0.0
        %244 = vmatprep.subr.mxu0 0.0
        %245 = vmatpush1.msra.mxu0 0.0
        %246 = vmatprep.subr.mxu0 0.0
        %247 = vmatpush1.msra.mxu0 0.0
        %248 = vmatprep.subr.mxu0 0.0
        %249 = vmatpush1.msra.mxu0 0.0
        %250 = vmatprep.subr.mxu0 %v210
        %251 = vmatpush1.msra.mxu0 %v209
        %252 = vmatprep.subr.mxu0 0.0
        %253 = vmatpush2.msra.mxu0 0.0
        %254 = vmatprep.subr.mxu0 0.0
        %255 = vmatpush2.msra.mxu0 0.0
        %256 = vmatprep.subr.mxu0 0.0
        %257 = vmatpush2.msra.mxu0 0.0
        %258 = vmatprep.subr.mxu0 0.0
        %259 = vmatpush2.msra.mxu0 0.0
        %260 = vmatprep.subr.mxu0 0.0
        %261 = vmatpush2.msra.mxu0 0.0
        %262 = vmatprep.subr.mxu0 0.0
        %263 = vmatpush2.msra.mxu0 0.0
        %264 = vmatprep.subr.mxu0 0.0
        %265 = vmatpush2.msra.mxu0 0.0
        %266 = vmatprep.subr.mxu0 0.0
        %267 = vmatpush2.msra.mxu0 0.0
        %268 = vmatprep.subr.mxu0 0.0
        %269 = vmatpush2.msra.mxu0 0.0
        %270 = vmatprep.subr.mxu0 0.0
        %271 = vmatpush2.msra.mxu0 0.0
        %272 = vmatprep.subr.mxu0 0.0
        %273 = vmatpush2.msra.mxu0 0.0
        %274 = vmatprep.subr.mxu0 0.0
        %275 = vmatpush2.msra.mxu0 0.0
        %276 = vmatprep.subr.mxu0 0.0
        %277 = vmatpush2.msra.mxu0 0.0
        %278 = vmatprep.subr.mxu0 0.0
        %279 = vmatpush2.msra.mxu0 0.0
        %280 = vmatprep.subr.mxu0 0.0
        %281 = vmatpush2.msra.mxu0 0.0
        %282 = vmatprep.subr.mxu0 0.0
        %283 = vmatpush2.msra.mxu0 0.0
        %284 = vmatprep.mubr.f32.mxu0 0.0
        %285 = vmatmul.mubr.f32.gmra.mxu0 %v218
        %v286 = vpop.f32.mrf.mxu0
        %v287 = vadd.f32 %v214, %v286
        %v288 = vpop.f32.mrf.mxu0
        %v289 = vadd.f32 %v214, %v288
        %290 = vdwg.mxu0
        %v293 = vcombine.low %v287, %v289
        %295 = vst [vmem:[%s204] sm:$0xff] %v293
        %s296 = sand.u32 %s112, 1
        %s297 = scalar_lea.sflag [#allocation4], %s296
        %s298 = sand.u32 %s112, 1
        %s299 = smul.addr %s298, 8
        %s300 = scalar_lea.vmem [#allocation5], %s299
        // Predicated region
        $region37: #{tpu_custom_call.1} parent=31 // pred_check
          %p301 = pneg %p122
        $region38: #{tpu_custom_call.1} parent=31 // pred_check_branch
          %303 = sbr.rel (%p301) target = $region40
        $region39: #{tpu_custom_call.1} parent=31 // pred_region
          %s304 = smul.u32 2, %s25
          %s306 = ssub.s32 128, 128
          %307 = vsyncadd %s297, %s306
          %s308 = smul.addr %s24, 2
          %s309 = sadd.s32 %s304, %s308
          %s310 = smul.addr %s309, 64
          %s311 = scalar_lea.hbm %s3, %s310
          %s313 = sshll.u32 %s300, 4
          %s314 = int_to_ptr.vmem [resolvable:$true] %s313
          %316 = dma.vmem_to_hbm [thread:$0]  %s314, 128, %s311, %s297
        $region40: #{tpu_custom_call.1} parent=31 // pred_fallthru
          _
      $region32: #{tpu_custom_call.1} parent=5 // pred_fallthru
        _
      %p317 = scmp.le.s32.totalorder 2, %s15
      // Predicated region
      $region41: #{tpu_custom_call.1} parent=5 // pred_check
        %p318 = pneg %p317
      $region42: #{tpu_custom_call.1} parent=5 // pred_check_branch
        %320 = sbr.rel (%p318) target = $region44
      $region43: #{tpu_custom_call.1} parent=5 // pred_region
        %s321 = ssub.s32 %s15, 2
        // Predicated region
        $region45: #{tpu_custom_call.1} parent=43 // pred_check
          %p322 = pneg %p128
        $region46: #{tpu_custom_call.1} parent=43 // pred_check_branch
          %324 = sbr.rel (%p322) target = $region48
        $region47: #{tpu_custom_call.1} parent=43 // pred_region
          %s325 = sand.u32 %s113, 1
          %s326 = scalar_lea.sflag [#allocation4], %s325
          %s327 = sand.u32 %s113, 1
          %s328 = smul.addr %s327, 8
          %s329 = scalar_lea.vmem [#allocation5], %s328
          %330 = dma.done %s326, 128
        $region48: #{tpu_custom_call.1} parent=43 // pred_fallthru
          _
      $region44: #{tpu_custom_call.1} parent=5 // pred_fallthru
        _
    $region6: #{tpu_custom_call.1} parent=1 // loop_footer
      %s19 = sadd.s32 1, %s15
    $region7: #{tpu_custom_call.1} parent=1 // loop_footer_branch
      %14 = sbr.rel target = $region3
    $region8: #{tpu_custom_call.1} parent=1 // loop_exit
      _
    %331 = vsyncpa [#allocation3], 1
    %s332 = scalar_lea.sflag [#allocation3], 1
    %333 = vsyncpa %s332, 1
    %334 = vsyncpa [#allocation4], 1
    %s335 = scalar_lea.sflag [#allocation4], 1
    %336 = vsyncpa %s335, 1

</llo_original>
